<compile_context>
chip_gen: v7x
topology: tpu7x:2x2x1
jax: 0.10.0
libtpu: 0.0.40
codegen_flags: <defaults>
</compile_context>

<pallas_src>
import jax
import jax.numpy as jnp
from jax.experimental import pallas as pl
from jax.experimental.pallas import tpu as pltpu


def _round_up(a: int, b: int) -> int:
    return ((a + b - 1) // b) * b


def _pick_tk(nf_pad: int, cap: int = 2048) -> int:
    """Largest multiple of 128 that divides nf_pad and is <= cap."""
    best = 128
    d = 128
    limit = min(cap, nf_pad)
    while d <= limit:
        if nf_pad % d == 0:
            best = d
        d += 128
    return best


def _flatten_head_kernel(x_ref, w_ref, b_ref, o_ref):
    # x_ref: [TM, TK] (native dtype)        w_ref: [TK or NF_PAD, TP] bf16
    # b_ref: [1, TP] f32                    o_ref: [TM, TP] f32 (K-resident acc)
    k = pl.program_id(1)
    tm, tk = x_ref.shape

    if w_ref.shape[0] == tk:
        # Streaming weight (or a single K tile): use the whole block.
        w = w_ref[...]
    else:
        # Resident weight: slice the current K chunk in-kernel.
        w = w_ref[pl.ds(pl.multiple_of(k * tk, 128), tk), :]

    part = jnp.dot(x_ref[...].astype(jnp.bfloat16), w,
                   preferred_element_type=jnp.float32)

    @pl.when(k == 0)
    def _init():
        o_ref[...] = part + b_ref[...]

    @pl.when(k != 0)
    def _accum():
        o_ref[...] += part


def prepare_flatten_head_params(weight, bias):
    """One-time parameter prep (call at setup, NOT per forward).

    weight: [target_window, nf] (PyTorch nn.Linear layout), bias: [target_window].
    Returns (w_t_pad [nf_pad, t_pad] bf16, bias_pad [1, t_pad] f32, meta).
    """
    target_window, nf = weight.shape
    t_pad = _round_up(target_window, 128)   # lane-dense output; do NOT pad further
    nf_pad = _round_up(nf, 128)

    w_t_pad = jnp.zeros((nf_pad, t_pad), jnp.bfloat16)
    w_t_pad = w_t_pad.at[:nf, :target_window].set(weight.T.astype(jnp.bfloat16))
    bias_pad = jnp.zeros((1, t_pad), jnp.float32)
    bias_pad = bias_pad.at[:, :target_window].set(bias.astype(jnp.float32))

    meta = {"nf": nf, "target_window": target_window}
    return w_t_pad, bias_pad, meta


def flatten_head_forward(x, w_t_pad, bias_pad, meta, *, tm=512, tk_cap=2048):
    """x: [B, n_vars, d_model, patch_num] -> [B, n_vars, target_window] (f32)."""
    B, n_vars, d_model, patch_num = x.shape
    nf = d_model * patch_num
    assert nf == meta["nf"], "weight was prepared for a different nf"
    nf_pad, t_pad = w_t_pad.shape
    target_window = meta["target_window"]

    M = B * n_vars
    tk = _pick_tk(nf_pad, tk_cap)

    # v7x: guarantee >= 2 M tiles when there is enough work, so the "parallel"
    # grid axis spans both TensorCores. (Harmless on single-TC v5e/v6e.)
    if M >= 16:
        tm_cap = _round_up(-(-M // 2), 8)
    else:
        tm_cap = _round_up(M, 8)
    tm_eff = max(8, min(tm, tm_cap))

    # Flatten(start_dim=-2): row-major merge of (d_model, patch_num) -> nf.
    # No dtype cast here (cast happens in-kernel); no M padding at all.
    x2d = x.reshape(M, nf)
    if nf_pad != nf:
        # Rare fallback (nf not a multiple of 128): zero-pad K only.
        x2d = jnp.pad(x2d, ((0, 0), (0, nf_pad - nf)))

    # Keep the (small) weight resident in VMEM when it fits.
    w_bytes = nf_pad * t_pad * 2
    resident = w_bytes <= (8 << 20)
    if resident:
        w_spec = pl.BlockSpec((nf_pad, t_pad), lambda i, k: (0, 0))
    else:
        w_spec = pl.BlockSpec((tk, t_pad), lambda i, k: (k, 0))

    n_m_tiles = pl.cdiv(M, tm_eff)
    grid = (n_m_tiles, nf_pad // tk)                 # reduction (K) axis LAST

    x_bytes = jnp.dtype(x.dtype).itemsize
    # VMEM budget: double-buffered x + out, weight (count 2x to be safe), bias.
    needed = (2 * tm_eff * tk * x_bytes
              + (2 * w_bytes if resident else 2 * tk * t_pad * 2)
              + 2 * t_pad * 4
              + 2 * tm_eff * t_pad * 4)
    vmem_limit = int(min(max(needed + (4 << 20), 16 << 20), 48 << 20))

    cost = pl.CostEstimate(
        flops=2 * M * nf_pad * t_pad,
        transcendentals=0,
        bytes_accessed=(M * nf_pad * x_bytes
                        + (w_bytes if resident else w_bytes * n_m_tiles)
                        + t_pad * 4
                        + M * t_pad * 4),
    )

    out_pad = pl.pallas_call(
        _flatten_head_kernel,
        out_shape=jax.ShapeDtypeStruct((M, t_pad), jnp.float32),
        grid_spec=pltpu.PrefetchScalarGridSpec(
            num_scalar_prefetch=0,
            grid=grid,
            in_specs=[
                pl.BlockSpec((tm_eff, tk), lambda i, k: (i, k)),   # x tile
                w_spec,                                            # weight
                pl.BlockSpec((1, t_pad), lambda i, k: (0, 0)),     # bias (resident)
            ],
            out_specs=pl.BlockSpec((tm_eff, t_pad), lambda i, k: (i, 0)),
        ),
        compiler_params=pltpu.CompilerParams(
            dimension_semantics=("parallel", "arbitrary"),
            vmem_limit_bytes=vmem_limit),
        cost_estimate=cost,
    )(x2d, w_t_pad, bias_pad)

    # Dropout with head_dropout=0 (or eval mode) is identity.
    return out_pad[:, :target_window].reshape(B, n_vars, target_window)


if __name__ == "__main__":
    # Small shapes consistent with the module's forward.
    B, n_vars, d_model, patch_num = 2, 4, 16, 16
    nf = d_model * patch_num            # 256
    target_window = 96

    key = jax.random.PRNGKey(0)
    kx, kw, kb = jax.random.split(key, 3)

    x = jax.random.normal(kx, (B, n_vars, d_model, patch_num), dtype=jnp.float32)
    # Deterministic synthetic parameters in PyTorch Linear layout.
    weight = jax.random.normal(kw, (target_window, nf), dtype=jnp.float32) / jnp.sqrt(nf)
    bias = jax.random.normal(kb, (target_window,), dtype=jnp.float32) * 0.01

    # One-time prep: transpose + pad + bf16 cast hoisted out of the per-call path.
    w_t_pad, bias_pad, meta = prepare_flatten_head_params(weight, bias)

    out = flatten_head_forward(x, w_t_pad, bias_pad, meta)
    jax.block_until_ready(out)

    # Reference check in plain JAX (f32). bf16 weight + in-kernel bf16 activations
    # with f32 accumulation -> loose tolerance.
    ref = x.reshape(B, n_vars, nf) @ weight.T + bias
    assert out.shape == (B, n_vars, target_window)
    assert jnp.allclose(out, ref, atol=5e-2, rtol=5e-2), float(jnp.max(jnp.abs(out - ref)))

    print("KERNEL_OK")
</pallas_src>

<mosaic_0001>
module attributes {stable_mosaic.version = 11 : i64} {
  func.func @_flatten_head_kernel(%arg0: i32, %arg1: i32, %arg2: memref<8x256xf32, #tpu.memory_space<vmem>>, %arg3: memref<256x128xbf16, #tpu.memory_space<vmem>>, %arg4: memref<1x128xf32, #tpu.memory_space<vmem>>, %arg5: memref<8x128xf32, #tpu.memory_space<vmem>>) attributes {dimension_semantics = [#tpu.dimension_semantics<parallel>, #tpu.dimension_semantics<arbitrary>], iteration_bounds = array<i64: 1, 1>, scalar_prefetch = 0 : i64, scratch_operands = 0 : i64, tpu.core_type = #tpu.core_type<tc>, window_params = [{transform_indices = @transform_0, window_bounds = array<i64: 8, 256>}, {pipeline_mode = #tpu.pipeline_mode<synchronous>, transform_indices = @transform_1, window_bounds = array<i64: 256, 128>}, {pipeline_mode = #tpu.pipeline_mode<synchronous>, transform_indices = @transform_2, window_bounds = array<i64: 1, 128>}, {transform_indices = @transform_3, window_bounds = array<i64: 8, 128>}]} {
    %c0 = arith.constant 0 : index
    %c0_0 = arith.constant 0 : index
    %0 = vector.load %arg3[%c0, %c0_0] : memref<256x128xbf16, #tpu.memory_space<vmem>>, vector<256x128xbf16>
    %c0_1 = arith.constant 0 : index
    %c0_2 = arith.constant 0 : index
    %1 = vector.load %arg2[%c0_1, %c0_2] : memref<8x256xf32, #tpu.memory_space<vmem>>, vector<8x256xf32>
    %2 = arith.truncf %1 : vector<8x256xf32> to vector<8x256xbf16>
    %cst = arith.constant dense<0.000000e+00> : vector<8x128xf32>
    %3 = tpu.matmul %2, %0, %cst {dimension_numbers = #tpu.dot_dimension_numbers<[1], [0], [0], [1], [0, 0, 1, 1], [], []>} : vector<8x256xbf16>, vector<256x128xbf16>, vector<8x128xf32> -> vector<8x128xf32>
    %c0_i32 = arith.constant 0 : i32
    %4 = arith.cmpi eq, %arg1, %c0_i32 : i32
    %5 = arith.extui %4 : i1 to i32
    %c0_i32_3 = arith.constant 0 : i32
    %6 = arith.cmpi ne, %5, %c0_i32_3 : i32
    scf.if %6 {
      %c0_6 = arith.constant 0 : index
      %c0_7 = arith.constant 0 : index
      %10 = vector.load %arg4[%c0_6, %c0_7] : memref<1x128xf32, #tpu.memory_space<vmem>>, vector<1x128xf32>
      %11 = vector.broadcast %10 : vector<1x128xf32> to vector<8x128xf32>
      %12 = arith.addf %3, %11 : vector<8x128xf32>
      %c0_8 = arith.constant 0 : index
      %c0_9 = arith.constant 0 : index
      %13 = vector.load %arg5[%c0_8, %c0_9] : memref<8x128xf32, #tpu.memory_space<vmem>>, vector<8x128xf32>
      tpu.vector_store %arg5[%c0_8, %c0_9], %12 {strides = array<i32>} : memref<8x128xf32, #tpu.memory_space<vmem>>, vector<8x128xf32>,
    } else {
    }
    %c0_i32_4 = arith.constant 0 : i32
    %7 = arith.cmpi ne, %arg1, %c0_i32_4 : i32
    %8 = arith.extui %7 : i1 to i32
    %c0_i32_5 = arith.constant 0 : i32
    %9 = arith.cmpi ne, %8, %c0_i32_5 : i32
    scf.if %9 {
      %c0_6 = arith.constant 0 : index
      %c0_7 = arith.constant 0 : index
      %10 = vector.load %arg5[%c0_6, %c0_7] : memref<8x128xf32, #tpu.memory_space<vmem>>, vector<8x128xf32>
      %11 = arith.addf %10, %3 : vector<8x128xf32>
      %c0_8 = arith.constant 0 : index
      %c0_9 = arith.constant 0 : index
      %12 = vector.load %arg5[%c0_8, %c0_9] : memref<8x128xf32, #tpu.memory_space<vmem>>, vector<8x128xf32>
      tpu.vector_store %arg5[%c0_8, %c0_9], %11 {strides = array<i32>} : memref<8x128xf32, #tpu.memory_space<vmem>>, vector<8x128xf32>,
    } else {
    }
    return
  }
  func.func @transform_0(%arg0: i32, %arg1: i32) -> (i32, i32) {
    %c0_i32 = arith.constant 0 : i32
    return %arg0, %arg1 : i32, i32
  }
  func.func @transform_1(%arg0: i32, %arg1: i32) -> (i32, i32) {
    %c0_i32 = arith.constant 0 : i32
    %c0_i32_0 = arith.constant 0 : i32
    %c0_i32_1 = arith.constant 0 : i32
    return %c0_i32, %c0_i32_0 : i32, i32
  }
  func.func @transform_2(%arg0: i32, %arg1: i32) -> (i32, i32) {
    %c0_i32 = arith.constant 0 : i32
    %c0_i32_0 = arith.constant 0 : i32
    %c0_i32_1 = arith.constant 0 : i32
    return %c0_i32, %c0_i32_0 : i32, i32
  }
  func.func @transform_3(%arg0: i32, %arg1: i32) -> (i32, i32) {
    %c0_i32 = arith.constant 0 : i32
    %c0_i32_0 = arith.constant 0 : i32
    return %arg0, %c0_i32 : i32, i32
  }
}

</mosaic_0001>

<llo_original>
// kernel: tpu_custom_call.1
$region0: #{tpu_custom_call.1}
  #allocation0 [shape = 'u32[]', space=smem, size = 0x4, offset = 0x4, fixed_abs, tag = 'smem constant byte address 0x4 - core index']
  #allocation1 [shape = 'u32[144,128]{1,0:T(1,128)}', space=vmem, size = 0x12000, scoped, tag = 'internal scratch']
  %s0 = inlined_call_operand.hbm [shape: f32[8,256], index: 0, kind: input, shape index: {}]
  %s1 = inlined_call_operand.hbm [shape: bf16[256,128], index: 1, kind: input, shape index: {}]
  %s2 = inlined_call_operand.vmem [shape: f32[1,128], index: 2, kind: input, shape index: {}]
  %s3 = inlined_call_operand.hbm [shape: f32[8,128], index: 3, kind: output, shape index: {}]
  %s4 = sld [smem:[#allocation0]]
  $region38: #{tpu_custom_call.1} parent=0
    _
  %s6 = ssub.s32 1, %s4
  %s7 = scalar_select 0, %s6, %s4
  $region1: #{tpu_custom_call.1} parent=0
    #allocation2 [shape = 'u8[8192]{0}', space=vmem, size = 0x2000, scoped, tag = 'input window, operand 0, single buffered']
    #allocation3 [shape = 's32[1]{0}', space=sflag, size = 0x4, scoped, tag = 'scoped memory for tpu_custom_call.1']
    #allocation4 [shape = 's32[1]{0}', space=sflag, size = 0x4, scoped, tag = 'scoped memory for tpu_custom_call.1']
    #allocation5 [shape = 'u8[65536]{0}', space=vmem, size = 0x10000, scoped, tag = 'input window, operand 1, single buffered']
    #allocation6 [shape = 's32[1]{0}', space=sflag, size = 0x4, scoped, tag = 'scoped memory for tpu_custom_call.1']
    #allocation7 [shape = 'u8[4096]{0}', space=vmem, size = 0x1000, scoped, tag = 'output window, operand 0, single buffered']
    %8 = vsyncpa [#allocation3], 0
    %9 = vsyncpa [#allocation6], 0
    %10 = vsyncpa [#allocation4], 0
    // Predicated region
    $region2: #{tpu_custom_call.1} parent=1 // pred_check
      _
    $region3: #{tpu_custom_call.1} parent=1 // pred_check_branch
      %12 = sbr.rel (0) target = $region5
    $region4: #{tpu_custom_call.1} parent=1 // pred_region
      %s14 = ssub.s32 256, 256
      %15 = vsyncadd [#allocation3], %s14
      %s17 = sshll.u32 [#allocation2], 4
      %s18 = int_to_ptr.vmem [resolvable:$true] %s17
      %20 = dma.hbm_to_vmem [thread:$0]  %s0, 256, %s18, [#allocation3]
    $region5: #{tpu_custom_call.1} parent=1 // pred_fallthru
      _
    // Predicated region
    $region6: #{tpu_custom_call.1} parent=1 // pred_check
      _
    $region7: #{tpu_custom_call.1} parent=1 // pred_check_branch
      %22 = sbr.rel (0) target = $region9
    $region8: #{tpu_custom_call.1} parent=1 // pred_region
      %s24 = ssub.s32 2048, 2048
      %25 = vsyncadd [#allocation6], %s24
      %s26 = sshll.u32 [#allocation5], 4
      %s27 = int_to_ptr.vmem [resolvable:$true] %s26
      %32 = dma.hbm_to_vmem [thread:$0]  %s1, 2048, %s27, [#allocation6], 64, 64, 4
    $region9: #{tpu_custom_call.1} parent=1 // pred_fallthru
      _
    // Predicated region
    $region10: #{tpu_custom_call.1} parent=1 // pred_check
      _
    $region11: #{tpu_custom_call.1} parent=1 // pred_check_branch
      %34 = sbr.rel (0) target = $region13
    $region12: #{tpu_custom_call.1} parent=1 // pred_region
      _
    $region13: #{tpu_custom_call.1} parent=1 // pred_fallthru
      _
    // Predicated region
    $region14: #{tpu_custom_call.1} parent=1 // pred_check
      _
    $region15: #{tpu_custom_call.1} parent=1 // pred_check_branch
      %36 = sbr.rel (0) target = $region17
    $region16: #{tpu_custom_call.1} parent=1 // pred_region
      %37 = dma.done [#allocation3], 256
    $region17: #{tpu_custom_call.1} parent=1 // pred_fallthru
      _
    // Predicated region
    $region18: #{tpu_custom_call.1} parent=1 // pred_check
      _
    $region19: #{tpu_custom_call.1} parent=1 // pred_check_branch
      %39 = sbr.rel (0) target = $region21
    $region20: #{tpu_custom_call.1} parent=1 // pred_region
      %40 = dma.done [#allocation6], 2048
    $region21: #{tpu_custom_call.1} parent=1 // pred_fallthru
      _
    %v42 = vld [vmem:[#allocation5] sm:$0xf]
    %v43 = vld [vmem:[#allocation5 + $0x4] sm:$0xf]
    %v44 = vld [vmem:[#allocation5 + $0x8] sm:$0xf]
    %v45 = vld [vmem:[#allocation5 + $0xc] sm:$0xf]
    %v46 = vld [vmem:[#allocation5 + $0x10] sm:$0xf]
    %v47 = vld [vmem:[#allocation5 + $0x14] sm:$0xf]
    %v48 = vld [vmem:[#allocation5 + $0x18] sm:$0xf]
    %v49 = vld [vmem:[#allocation5 + $0x1c] sm:$0xf]
    %v50 = vld [vmem:[#allocation5 + $0x20] sm:$0xf]
    %v51 = vld [vmem:[#allocation5 + $0x24] sm:$0xf]
    %v52 = vld [vmem:[#allocation5 + $0x28] sm:$0xf]
    %v53 = vld [vmem:[#allocation5 + $0x2c] sm:$0xf]
    %v54 = vld [vmem:[#allocation5 + $0x30] sm:$0xf]
    %v55 = vld [vmem:[#allocation5 + $0x34] sm:$0xf]
    %v56 = vld [vmem:[#allocation5 + $0x38] sm:$0xf]
    %v57 = vld [vmem:[#allocation5 + $0x3c] sm:$0xf]
    %v58 = vld [vmem:[#allocation5 + $0x40] sm:$0xf]
    %v59 = vld [vmem:[#allocation5 + $0x44] sm:$0xf]
    %v60 = vld [vmem:[#allocation5 + $0x48] sm:$0xf]
    %v61 = vld [vmem:[#allocation5 + $0x4c] sm:$0xf]
    %v62 = vld [vmem:[#allocation5 + $0x50] sm:$0xf]
    %v63 = vld [vmem:[#allocation5 + $0x54] sm:$0xf]
    %v64 = vld [vmem:[#allocation5 + $0x58] sm:$0xf]
    %v65 = vld [vmem:[#allocation5 + $0x5c] sm:$0xf]
    %v66 = vld [vmem:[#allocation5 + $0x60] sm:$0xf]
    %v67 = vld [vmem:[#allocation5 + $0x64] sm:$0xf]
    %v68 = vld [vmem:[#allocation5 + $0x68] sm:$0xf]
    %v69 = vld [vmem:[#allocation5 + $0x6c] sm:$0xf]
    %v70 = vld [vmem:[#allocation5 + $0x70] sm:$0xf]
    %v71 = vld [vmem:[#allocation5 + $0x74] sm:$0xf]
    %v72 = vld [vmem:[#allocation5 + $0x78] sm:$0xf]
    %v73 = vld [vmem:[#allocation5 + $0x7c] sm:$0xf]
    %v74 = vld [vmem:[#allocation2] sm:$0xff]
    %v75 = vld [vmem:[#allocation2 + $0x8] sm:$0xff]
    %v76 = vpack.c.bf16 %v74, %v74
    %v77 = vpack.c.bf16 %v75, %v75
    %v110 = vunpack.c.l.b16 %v42
    %v111 = vunpack.c.l.b16 %v43
    %v112 = vunpack.c.l.b16 %v44
    %v113 = vunpack.c.l.b16 %v45
    %v114 = vunpack.c.l.b16 %v46
    %v115 = vunpack.c.l.b16 %v47
    %v116 = vunpack.c.l.b16 %v48
    %v117 = vunpack.c.l.b16 %v49
    %v118 = vunpack.c.l.b16 %v50
    %v119 = vunpack.c.l.b16 %v51
    %v120 = vunpack.c.l.b16 %v52
    %v121 = vunpack.c.l.b16 %v53
    %v122 = vunpack.c.l.b16 %v54
    %v123 = vunpack.c.l.b16 %v55
    %v124 = vunpack.c.l.b16 %v56
    %v125 = vunpack.c.l.b16 %v57
    %v126 = vunpack.c.l.b16 %v58
    %v127 = vunpack.c.l.b16 %v59
    %v128 = vunpack.c.l.b16 %v60
    %v129 = vunpack.c.l.b16 %v61
    %v130 = vunpack.c.l.b16 %v62
    %v131 = vunpack.c.l.b16 %v63
    %v132 = vunpack.c.l.b16 %v64
    %v133 = vunpack.c.l.b16 %v65
    %v134 = vunpack.c.l.b16 %v66
    %v135 = vunpack.c.l.b16 %v67
    %v136 = vunpack.c.l.b16 %v68
    %v137 = vunpack.c.l.b16 %v69
    %v138 = vunpack.c.l.b16 %v70
    %v139 = vunpack.c.l.b16 %v71
    %v140 = vunpack.c.l.b16 %v72
    %v141 = vunpack.c.l.b16 %v73
    %v142 = vpack.c.b16 %v111, %v110
    %v143 = vpack.c.b16 %v113, %v112
    %v144 = vpack.c.b16 %v115, %v114
    %v145 = vpack.c.b16 %v117, %v116
    %v146 = vpack.c.b16 %v119, %v118
    %v147 = vpack.c.b16 %v121, %v120
    %v148 = vpack.c.b16 %v123, %v122
    %v149 = vpack.c.b16 %v125, %v124
    %v150 = vpack.c.b16 %v127, %v126
    %v151 = vpack.c.b16 %v129, %v128
    %v152 = vpack.c.b16 %v131, %v130
    %v153 = vpack.c.b16 %v133, %v132
    %v154 = vpack.c.b16 %v135, %v134
    %v155 = vpack.c.b16 %v137, %v136
    %v156 = vpack.c.b16 %v139, %v138
    %v157 = vpack.c.b16 %v141, %v140
    %174 = vmatprep.subr.bf16.mxu0 0
    %175 = vmatpush1.bf16.msra.mxu0 %v142
    %176 = vmatprep.subr.bf16.mxu0 0
    %177 = vmatpush1.bf16.msra.mxu0 %v143
    %178 = vmatprep.subr.bf16.mxu0 0
    %179 = vmatpush1.bf16.msra.mxu0 %v144
    %180 = vmatprep.subr.bf16.mxu0 0
    %181 = vmatpush1.bf16.msra.mxu0 %v145
    %182 = vmatprep.subr.bf16.mxu0 0
    %183 = vmatpush1.bf16.msra.mxu0 %v146
    %184 = vmatprep.subr.bf16.mxu0 0
    %185 = vmatpush1.bf16.msra.mxu0 %v147
    %186 = vmatprep.subr.bf16.mxu0 0
    %187 = vmatpush1.bf16.msra.mxu0 %v148
    %188 = vmatprep.subr.bf16.mxu0 0
    %189 = vmatpush1.bf16.msra.mxu0 %v149
    %190 = vmatprep.subr.bf16.mxu0 0
    %191 = vmatpush1.bf16.msra.mxu0 %v150
    %192 = vmatprep.subr.bf16.mxu0 0
    %193 = vmatpush1.bf16.msra.mxu0 %v151
    %194 = vmatprep.subr.bf16.mxu0 0
    %195 = vmatpush1.bf16.msra.mxu0 %v152
    %196 = vmatprep.subr.bf16.mxu0 0
    %197 = vmatpush1.bf16.msra.mxu0 %v153
    %198 = vmatprep.subr.bf16.mxu0 0
    %199 = vmatpush1.bf16.msra.mxu0 %v154
    %200 = vmatprep.subr.bf16.mxu0 0
    %201 = vmatpush1.bf16.msra.mxu0 %v155
    %202 = vmatprep.subr.bf16.mxu0 0
    %203 = vmatpush1.bf16.msra.mxu0 %v156
    %204 = vmatprep.subr.bf16.mxu0 0
    %205 = vmatpush1.bf16.msra.mxu0 %v157
    %206 = vmatprep.mubr.bf16.mxu0 %v77
    %207 = vmatmul.mubr.bf16.gmra.mrb[0].mxu0 %v76
    %v208 = vpop.f32.mrb[0].mxu0
    %v209 = vadd.f32 0.0, %v208
    %v210 = vpop.f32.mrb[0].mxu0
    %v211 = vpop.f32.mrb[0].mxu0
    %v212 = vpop.f32.mrb[0].mxu0
    %213 = vdwg.mxu0
    %p214 = scmp.eq.s32.totalorder 0, 0
    // Predicated region
    $region22: #{tpu_custom_call.1} parent=1 // pred_check
      %p215 = pneg %p214
    $region23: #{tpu_custom_call.1} parent=1 // pred_check_branch
      %217 = sbr.rel (%p215) target = $region25
    $region24: #{tpu_custom_call.1} parent=1 // pred_region
      %v218 = vld [vmem:[%s2] sm:$0x1]
      %v220 = vlaneseq
      %v221 = vshrl.u32 %v220, 7
      %v222 = vsub.s32 0, %v221
      %v223 = vrot.slane %v218, %v222
      %v225 = vadd.f32 %v209, %v223
      %226 = vst [vmem:[#allocation7] sm:$0xff] %v225
    $region25: #{tpu_custom_call.1} parent=1 // pred_fallthru
      _
    %p227 = scmp.ne.s32.totalorder 0, 0
    // Predicated region
    $region26: #{tpu_custom_call.1} parent=1 // pred_check
      %p228 = pneg %p227
    $region27: #{tpu_custom_call.1} parent=1 // pred_check_branch
      %230 = sbr.rel (%p228) target = $region29
    $region28: #{tpu_custom_call.1} parent=1 // pred_region
      %v231 = vld [vmem:[#allocation7] sm:$0xff]
      %v232 = vadd.f32 %v231, %v209
      %233 = vst [vmem:[#allocation7] sm:$0xff] %v232
    $region29: #{tpu_custom_call.1} parent=1 // pred_fallthru
      _
    // Predicated region
    $region30: #{tpu_custom_call.1} parent=1 // pred_check
      _
    $region31: #{tpu_custom_call.1} parent=1 // pred_check_branch
      %235 = sbr.rel (0) target = $region33
    $region32: #{tpu_custom_call.1} parent=1 // pred_region
      %s237 = ssub.s32 128, 128
      %238 = vsyncadd [#allocation4], %s237
      %s240 = sshll.u32 [#allocation7], 4
      %s241 = int_to_ptr.vmem [resolvable:$true] %s240
      %243 = dma.vmem_to_hbm [thread:$0]  %s241, 128, %s3, [#allocation4]
    $region33: #{tpu_custom_call.1} parent=1 // pred_fallthru
      _
    // Predicated region
    $region34: #{tpu_custom_call.1} parent=1 // pred_check
      _
    $region35: #{tpu_custom_call.1} parent=1 // pred_check_branch
      %245 = sbr.rel (0) target = $region37
    $region36: #{tpu_custom_call.1} parent=1 // pred_region
      %246 = dma.done [#allocation4], 128
    $region37: #{tpu_custom_call.1} parent=1 // pred_fallthru
      _
    %247 = vsyncpa [#allocation3], 1
    %248 = vsyncpa [#allocation6], 1
    %249 = vsyncpa [#allocation4], 1

</llo_original>
